<compile_context>
chip_gen: v7x
topology: tpu7x:2x2x1
jax: 0.10.0
libtpu: 0.0.40
codegen_flags: <defaults>
</compile_context>

<pallas_src>
import functools

import jax
import jax.numpy as jnp
from jax.experimental import pallas as pl
from jax.experimental.pallas import tpu as pltpu

LANES = 128  # one vreg lane group; each gate block is exactly one 128-lane block


def _gru_light_kernel(xx_ref, h0_ref, wih_ref, whh_ref, bihz_ref, bhhn_ref,
                      wout_ref, bout_ref, logp_ref, hpad_ref, *, hidden_size):
    H = hidden_size
    T = xx_ref.shape[0]

    # Input projection for BOTH directions and ALL timesteps in one MXU matmul,
    # kept as a value (no VMEM scratch).  b_ih (all gates) and b_hh (r,z) are
    # pre-folded into bihz_ref; only b_hn remains per step (inside r * (...)).
    gx = (jnp.dot(xx_ref[...], wih_ref[...], preferred_element_type=jnp.float32)
          + bihz_ref[...])                                           # (T, 256)

    whh = whh_ref[...]          # (128, 256) block-diagonal recurrent weights (vreg-resident)
    bhhn = bhhn_ref[...]        # (1, 128)   [b_hn_fwd | b_hn_bwd | 0...]
    h = h0_ref[...]             # (1, 128)   [h_fwd | h_bwd | 0...] — lives in vregs

    # Fully unrolled recurrence (T small & static): every slice is lane-aligned
    # (offset 0 or 128), no masked selects in the hot loop; the single lane rotate
    # (z extraction) rides the XLU slot in parallel with the tanh EUP push.
    for t in range(T):
        g = gx[t:t + 1, :]                                            # (1, 256)
        gh = jnp.dot(h, whh, preferred_element_type=jnp.float32)      # (1, 256)
        rz = jax.nn.sigmoid(g[:, :LANES] + gh[:, :LANES])             # [r_f r_b z_f z_b ..]
        n = jnp.tanh(g[:, LANES:] + rz * (gh[:, LANES:] + bhhn))      # [n_f n_b 0 ...]
        z = pltpu.roll(rz, LANES - 2 * H, axis=1)                     # z -> lanes 0:2H
        h = n + z * (h - n)            # == (1-z)*n + z*h; padding lanes stay exactly 0

    hpad_ref[...] = h                  # lane-dense (1,128) write; wrapper reshapes

    # Linear on cat(h_fwd, h_bwd) then LogSoftmax(dim=1).  Output-padding lanes carry
    # bias -1e30 so they contribute exp()=0.  Dropout(p=0.1) is identity in eval mode.
    logits = (jnp.dot(h, wout_ref[...], preferred_element_type=jnp.float32)
              + bout_ref[...])                                        # (1, Opad)
    m = jnp.max(logits, axis=1, keepdims=True)
    s = logits - m
    logp_ref[...] = s - jnp.log(jnp.sum(jnp.exp(s), axis=1, keepdims=True))


def pack_gru_light_params(params):
    """One-time packing of PyTorch-layout GRU/Linear params into the kernel layout.

    Column layout (width 2*LANES = 256):
      lanes [  0,128): r_fwd | r_bwd | z_fwd | z_bwd | pad      (rz block)
      lanes [128,256): n_fwd | n_bwd | pad                      (n block)
    Zero-padded rows/columns make all padding lanes mathematically inert."""
    H = params["w_hh"].shape[-1]
    I = params["w_ih"].shape[-1]
    O = params["b_out"].shape[-1]
    assert 4 * H <= LANES, "compact gate layout needs 4*hidden_size <= 128"
    # TODO(synk): tile the gate blocks over multiple 128-lane vregs for hidden_size > 32.
    W = 2 * LANES
    Opad = ((O + LANES - 1) // LANES) * LANES

    def gate_col(gate, d):
        return {"r": 0, "z": 2 * H, "n": LANES}[gate] + d * H

    def place_weights(dst, row_off, w, d):
        # w: (3H, in_dim), PyTorch gate order [r|z|n], for direction d.
        for gi, gate in enumerate(("r", "z", "n")):
            c = gate_col(gate, d)
            dst = dst.at[row_off:row_off + w.shape[1], c:c + H].set(
                w[gi * H:(gi + 1) * H, :].T)
        return dst

    # Input weights: rows 0:I act on x[t] (forward), rows I:2I on x[T-1-t] (backward).
    wih = jnp.zeros((2 * I, W), jnp.float32)
    wih = place_weights(wih, 0, params["w_ih"][0], 0)
    wih = place_weights(wih, I, params["w_ih"][1], 1)

    # Block-diagonal recurrent weights: rows 0:H act on h_fwd, rows H:2H on h_bwd.
    whh = jnp.zeros((LANES, W), jnp.float32)
    whh = place_weights(whh, 0, params["w_hh"][0], 0)
    whh = place_weights(whh, H, params["w_hh"][1], 1)

    # Biases: fold b_ih (all gates) + b_hh (r,z) into the input projection; keep b_hn.
    bihz = jnp.zeros((1, W), jnp.float32)
    bhhn = jnp.zeros((1, LANES), jnp.float32)
    for d in range(2):
        bi, bh = params["b_ih"][d], params["b_hh"][d]
        for gi, gate in enumerate(("r", "z", "n")):
            c = gate_col(gate, d)
            v = bi[gi * H:(gi + 1) * H]
            if gate != "n":
                v = v + bh[gi * H:(gi + 1) * H]
            bihz = bihz.at[0, c:c + H].set(v)
        bhhn = bhhn.at[0, d * H:(d + 1) * H].set(bh[2 * H:3 * H])

    # Output Linear, padded lane-dense; padding logits get bias -1e30 (exp -> 0).
    wout = jnp.zeros((LANES, Opad), jnp.float32)
    wout = wout.at[:2 * H, :O].set(params["w_out"].T)
    bout = jnp.full((1, Opad), -1e30, jnp.float32)
    bout = bout.at[0, :O].set(params["b_out"])

    return {"wih": wih, "whh": whh, "bihz": bihz, "bhhn": bhhn,
            "wout": wout, "bout": bout}


@functools.partial(jax.jit, static_argnames=("output_size",))
def gru_light_forward(x, h0, packed, *, output_size):
    """x: (T, I) f32; h0: (2, 1, H) f32; packed: pack_gru_light_params(...) output.

    Returns (log_probs (1, output_size), hidden (2, 1, H)), matching GRULight.forward
    in eval mode (Dropout is identity)."""
    H = h0.shape[-1]
    Opad = packed["bout"].shape[-1]

    xx = jnp.concatenate([x, x[::-1]], axis=1)                     # (T, 2I): [x | rev(x)]
    h0p = jnp.zeros((1, LANES), jnp.float32)
    h0p = h0p.at[0, :H].set(h0[0, 0]).at[0, H:2 * H].set(h0[1, 0])

    kernel = functools.partial(_gru_light_kernel, hidden_size=H)
    vmem = pl.BlockSpec(memory_space=pltpu.MemorySpace.VMEM)
    logp_pad, h_pad = pl.pallas_call(
        kernel,
        out_shape=(jax.ShapeDtypeStruct((1, Opad), jnp.float32),
                   jax.ShapeDtypeStruct((1, LANES), jnp.float32)),
        in_specs=[vmem] * 8,
        out_specs=(vmem, vmem),
    )(xx, h0p, packed["wih"], packed["whh"], packed["bihz"], packed["bhhn"],
      packed["wout"], packed["bout"])

    logp = logp_pad[:, :output_size]
    hidden = jnp.stack([h_pad[:, :H], h_pad[:, H:2 * H]], axis=0)  # (2, 1, H) like torch h_n
    return logp, hidden


def gru_light_reference(x, h0, params):
    """Pure-JAX reference mirroring PyTorch nn.GRU + Linear + LogSoftmax semantics."""
    H = h0.shape[-1]

    def run_dir(d, xs):
        wih, whh = params["w_ih"][d], params["w_hh"][d]
        bih, bhh = params["b_ih"][d], params["b_hh"][d]
        h = h0[d]                                       # (1, H)
        for t in range(xs.shape[0]):
            xt = xs[t:t + 1]                            # (1, I)
            gx = xt @ wih.T + bih
            gh = h @ whh.T + bhh
            r = jax.nn.sigmoid(gx[:, :H] + gh[:, :H])
            z = jax.nn.sigmoid(gx[:, H:2 * H] + gh[:, H:2 * H])
            n = jnp.tanh(gx[:, 2 * H:] + r * gh[:, 2 * H:])
            h = (1.0 - z) * n + z * h
        return h

    h_fwd = run_dir(0, x)
    h_bwd = run_dir(1, x[::-1])
    h_cat = jnp.concatenate([h_fwd, h_bwd], axis=1)     # (1, 2H)
    logits = h_cat @ params["w_out"].T + params["b_out"][None, :]
    logp = jax.nn.log_softmax(logits, axis=1)
    return logp, jnp.stack([h_fwd, h_bwd], axis=0)


def init_params(key, input_size, hidden_size, output_size):
    H = hidden_size
    k = 1.0 / jnp.sqrt(jnp.float32(H))
    ks = jax.random.split(key, 6)
    u = lambda kk, shape: jax.random.uniform(kk, shape, jnp.float32, -k, k)
    return {
        "w_ih": u(ks[0], (2, 3 * H, input_size)),
        "w_hh": u(ks[1], (2, 3 * H, H)),
        "b_ih": u(ks[2], (2, 3 * H)),
        "b_hh": u(ks[3], (2, 3 * H)),
        "w_out": u(ks[4], (output_size, 2 * H)),
        "b_out": u(ks[5], (output_size,)),
    }


if __name__ == "__main__":
    seq_len, input_size, hidden_size, output_size = 8, 16, 32, 64

    key = jax.random.PRNGKey(0)
    k_params, k_x, k_h = jax.random.split(key, 3)
    params = init_params(k_params, input_size, hidden_size, output_size)
    x = jax.random.normal(k_x, (seq_len, input_size), jnp.float32)
    h0 = jax.random.uniform(k_h, (2, 1, hidden_size), jnp.float32)  # init_hidden_random()

    packed = pack_gru_light_params(params)        # one-time weight packing (hoisted)
    logp, hidden = gru_light_forward(x, h0, packed, output_size=output_size)
    logp, hidden = jax.block_until_ready((logp, hidden))

    logp_ref, hidden_ref = gru_light_reference(x, h0, params)
    assert logp.shape == (1, output_size) and hidden.shape == (2, 1, hidden_size)
    assert jnp.allclose(logp, logp_ref, atol=5e-3, rtol=5e-3)
    assert jnp.allclose(hidden, hidden_ref, atol=5e-3, rtol=5e-3)

    print("KERNEL_OK")
</pallas_src>

<mosaic_0001>
module attributes {stable_mosaic.version = 11 : i64} {
  func.func @_gru_light_kernel(%arg0: memref<8x32xf32, #tpu.memory_space<vmem>>, %arg1: memref<1x128xf32, #tpu.memory_space<vmem>>, %arg2: memref<32x256xf32, #tpu.memory_space<vmem>>, %arg3: memref<128x256xf32, #tpu.memory_space<vmem>>, %arg4: memref<1x256xf32, #tpu.memory_space<vmem>>, %arg5: memref<1x128xf32, #tpu.memory_space<vmem>>, %arg6: memref<128x128xf32, #tpu.memory_space<vmem>>, %arg7: memref<1x128xf32, #tpu.memory_space<vmem>>, %arg8: memref<1x128xf32, #tpu.memory_space<vmem>>, %arg9: memref<1x128xf32, #tpu.memory_space<vmem>>) attributes {dimension_semantics = [], scalar_prefetch = 0 : i64, scratch_operands = 0 : i64, tpu.core_type = #tpu.core_type<tc>} {
    %c0 = arith.constant 0 : index
    %c0_0 = arith.constant 0 : index
    %0 = vector.load %arg0[%c0, %c0_0] : memref<8x32xf32, #tpu.memory_space<vmem>>, vector<8x32xf32>
    %c0_1 = arith.constant 0 : index
    %c0_2 = arith.constant 0 : index
    %1 = vector.load %arg2[%c0_1, %c0_2] : memref<32x256xf32, #tpu.memory_space<vmem>>, vector<32x256xf32>
    %cst = arith.constant dense<0.000000e+00> : vector<8x256xf32>
    %2 = tpu.matmul %0, %1, %cst {dimension_numbers = #tpu.dot_dimension_numbers<[1], [0], [0], [1], [0, 0, 1, 1], [], []>} : vector<8x32xf32>, vector<32x256xf32>, vector<8x256xf32> -> vector<8x256xf32>
    %c0_3 = arith.constant 0 : index
    %c0_4 = arith.constant 0 : index
    %3 = vector.load %arg4[%c0_3, %c0_4] : memref<1x256xf32, #tpu.memory_space<vmem>>, vector<1x256xf32>
    %4 = vector.broadcast %3 : vector<1x256xf32> to vector<8x256xf32>
    %5 = arith.addf %2, %4 : vector<8x256xf32>
    %c0_5 = arith.constant 0 : index
    %c0_6 = arith.constant 0 : index
    %6 = vector.load %arg3[%c0_5, %c0_6] : memref<128x256xf32, #tpu.memory_space<vmem>>, vector<128x256xf32>
    %c0_7 = arith.constant 0 : index
    %c0_8 = arith.constant 0 : index
    %7 = vector.load %arg5[%c0_7, %c0_8] : memref<1x128xf32, #tpu.memory_space<vmem>>, vector<1x128xf32>
    %c0_9 = arith.constant 0 : index
    %c0_10 = arith.constant 0 : index
    %8 = vector.load %arg1[%c0_9, %c0_10] : memref<1x128xf32, #tpu.memory_space<vmem>>, vector<1x128xf32>
    %9 = vector.extract_strided_slice %5 {offsets = [0, 0], sizes = [1, 256], strides = [1, 1]} : vector<8x256xf32> to vector<1x256xf32>
    %cst_11 = arith.constant dense<0.000000e+00> : vector<1x256xf32>
    %10 = tpu.matmul %8, %6, %cst_11 {dimension_numbers = #tpu.dot_dimension_numbers<[1], [0], [0], [1], [0, 0, 1, 1], [], []>} : vector<1x128xf32>, vector<128x256xf32>, vector<1x256xf32> -> vector<1x256xf32>
    %11 = vector.extract_strided_slice %9 {offsets = [0, 0], sizes = [1, 128], strides = [1, 1]} : vector<1x256xf32> to vector<1x128xf32>
    %12 = vector.extract_strided_slice %10 {offsets = [0, 0], sizes = [1, 128], strides = [1, 1]} : vector<1x256xf32> to vector<1x128xf32>
    %13 = arith.addf %11, %12 : vector<1x128xf32>
    %14 = arith.negf %13 : vector<1x128xf32>
    %15 = math.exp %14 : vector<1x128xf32>
    %cst_12 = arith.constant 1.000000e+00 : f32
    %16 = vector.broadcast %cst_12 : f32 to vector<1x128xf32>
    %17 = arith.addf %16, %15 : vector<1x128xf32>
    %18 = arith.divf %16, %17 : vector<1x128xf32>
    %19 = vector.extract_strided_slice %9 {offsets = [0, 128], sizes = [1, 128], strides = [1, 1]} : vector<1x256xf32> to vector<1x128xf32>
    %20 = vector.extract_strided_slice %10 {offsets = [0, 128], sizes = [1, 128], strides = [1, 1]} : vector<1x256xf32> to vector<1x128xf32>
    %21 = arith.addf %20, %7 : vector<1x128xf32>
    %22 = arith.mulf %18, %21 : vector<1x128xf32>
    %23 = arith.addf %19, %22 : vector<1x128xf32>
    %24 = math.tanh %23 : vector<1x128xf32>
    %c64_i32 = arith.constant 64 : i32
    %25 = tpu.dynamic_rotate %18 by %c64_i32 dim 1 : vector<1x128xf32>, i32 -> vector<1x128xf32>
    %26 = arith.subf %8, %24 : vector<1x128xf32>
    %27 = arith.mulf %25, %26 : vector<1x128xf32>
    %28 = arith.addf %24, %27 : vector<1x128xf32>
    %29 = vector.extract_strided_slice %5 {offsets = [1, 0], sizes = [1, 256], strides = [1, 1]} : vector<8x256xf32> to vector<1x256xf32>
    %cst_13 = arith.constant dense<0.000000e+00> : vector<1x256xf32>
    %30 = tpu.matmul %28, %6, %cst_13 {dimension_numbers = #tpu.dot_dimension_numbers<[1], [0], [0], [1], [0, 0, 1, 1], [], []>} : vector<1x128xf32>, vector<128x256xf32>, vector<1x256xf32> -> vector<1x256xf32>
    %31 = vector.extract_strided_slice %29 {offsets = [0, 0], sizes = [1, 128], strides = [1, 1]} : vector<1x256xf32> to vector<1x128xf32>
    %32 = vector.extract_strided_slice %30 {offsets = [0, 0], sizes = [1, 128], strides = [1, 1]} : vector<1x256xf32> to vector<1x128xf32>
    %33 = arith.addf %31, %32 : vector<1x128xf32>
    %34 = arith.negf %33 : vector<1x128xf32>
    %35 = math.exp %34 : vector<1x128xf32>
    %cst_14 = arith.constant 1.000000e+00 : f32
    %36 = vector.broadcast %cst_14 : f32 to vector<1x128xf32>
    %37 = arith.addf %36, %35 : vector<1x128xf32>
    %38 = arith.divf %36, %37 : vector<1x128xf32>
    %39 = vector.extract_strided_slice %29 {offsets = [0, 128], sizes = [1, 128], strides = [1, 1]} : vector<1x256xf32> to vector<1x128xf32>
    %40 = vector.extract_strided_slice %30 {offsets = [0, 128], sizes = [1, 128], strides = [1, 1]} : vector<1x256xf32> to vector<1x128xf32>
    %41 = arith.addf %40, %7 : vector<1x128xf32>
    %42 = arith.mulf %38, %41 : vector<1x128xf32>
    %43 = arith.addf %39, %42 : vector<1x128xf32>
    %44 = math.tanh %43 : vector<1x128xf32>
    %c64_i32_15 = arith.constant 64 : i32
    %45 = tpu.dynamic_rotate %38 by %c64_i32_15 dim 1 : vector<1x128xf32>, i32 -> vector<1x128xf32>
    %46 = arith.subf %28, %44 : vector<1x128xf32>
    %47 = arith.mulf %45, %46 : vector<1x128xf32>
    %48 = arith.addf %44, %47 : vector<1x128xf32>
    %49 = vector.extract_strided_slice %5 {offsets = [2, 0], sizes = [1, 256], strides = [1, 1]} : vector<8x256xf32> to vector<1x256xf32>
    %cst_16 = arith.constant dense<0.000000e+00> : vector<1x256xf32>
    %50 = tpu.matmul %48, %6, %cst_16 {dimension_numbers = #tpu.dot_dimension_numbers<[1], [0], [0], [1], [0, 0, 1, 1], [], []>} : vector<1x128xf32>, vector<128x256xf32>, vector<1x256xf32> -> vector<1x256xf32>
    %51 = vector.extract_strided_slice %49 {offsets = [0, 0], sizes = [1, 128], strides = [1, 1]} : vector<1x256xf32> to vector<1x128xf32>
    %52 = vector.extract_strided_slice %50 {offsets = [0, 0], sizes = [1, 128], strides = [1, 1]} : vector<1x256xf32> to vector<1x128xf32>
    %53 = arith.addf %51, %52 : vector<1x128xf32>
    %54 = arith.negf %53 : vector<1x128xf32>
    %55 = math.exp %54 : vector<1x128xf32>
    %cst_17 = arith.constant 1.000000e+00 : f32
    %56 = vector.broadcast %cst_17 : f32 to vector<1x128xf32>
    %57 = arith.addf %56, %55 : vector<1x128xf32>
    %58 = arith.divf %56, %57 : vector<1x128xf32>
    %59 = vector.extract_strided_slice %49 {offsets = [0, 128], sizes = [1, 128], strides = [1, 1]} : vector<1x256xf32> to vector<1x128xf32>
    %60 = vector.extract_strided_slice %50 {offsets = [0, 128], sizes = [1, 128], strides = [1, 1]} : vector<1x256xf32> to vector<1x128xf32>
    %61 = arith.addf %60, %7 : vector<1x128xf32>
    %62 = arith.mulf %58, %61 : vector<1x128xf32>
    %63 = arith.addf %59, %62 : vector<1x128xf32>
    %64 = math.tanh %63 : vector<1x128xf32>
    %c64_i32_18 = arith.constant 64 : i32
    %65 = tpu.dynamic_rotate %58 by %c64_i32_18 dim 1 : vector<1x128xf32>, i32 -> vector<1x128xf32>
    %66 = arith.subf %48, %64 : vector<1x128xf32>
    %67 = arith.mulf %65, %66 : vector<1x128xf32>
    %68 = arith.addf %64, %67 : vector<1x128xf32>
    %69 = vector.extract_strided_slice %5 {offsets = [3, 0], sizes = [1, 256], strides = [1, 1]} : vector<8x256xf32> to vector<1x256xf32>
    %cst_19 = arith.constant dense<0.000000e+00> : vector<1x256xf32>
    %70 = tpu.matmul %68, %6, %cst_19 {dimension_numbers = #tpu.dot_dimension_numbers<[1], [0], [0], [1], [0, 0, 1, 1], [], []>} : vector<1x128xf32>, vector<128x256xf32>, vector<1x256xf32> -> vector<1x256xf32>
    %71 = vector.extract_strided_slice %69 {offsets = [0, 0], sizes = [1, 128], strides = [1, 1]} : vector<1x256xf32> to vector<1x128xf32>
    %72 = vector.extract_strided_slice %70 {offsets = [0, 0], sizes = [1, 128], strides = [1, 1]} : vector<1x256xf32> to vector<1x128xf32>
    %73 = arith.addf %71, %72 : vector<1x128xf32>
    %74 = arith.negf %73 : vector<1x128xf32>
    %75 = math.exp %74 : vector<1x128xf32>
    %cst_20 = arith.constant 1.000000e+00 : f32
    %76 = vector.broadcast %cst_20 : f32 to vector<1x128xf32>
    %77 = arith.addf %76, %75 : vector<1x128xf32>
    %78 = arith.divf %76, %77 : vector<1x128xf32>
    %79 = vector.extract_strided_slice %69 {offsets = [0, 128], sizes = [1, 128], strides = [1, 1]} : vector<1x256xf32> to vector<1x128xf32>
    %80 = vector.extract_strided_slice %70 {offsets = [0, 128], sizes = [1, 128], strides = [1, 1]} : vector<1x256xf32> to vector<1x128xf32>
    %81 = arith.addf %80, %7 : vector<1x128xf32>
    %82 = arith.mulf %78, %81 : vector<1x128xf32>
    %83 = arith.addf %79, %82 : vector<1x128xf32>
    %84 = math.tanh %83 : vector<1x128xf32>
    %c64_i32_21 = arith.constant 64 : i32
    %85 = tpu.dynamic_rotate %78 by %c64_i32_21 dim 1 : vector<1x128xf32>, i32 -> vector<1x128xf32>
    %86 = arith.subf %68, %84 : vector<1x128xf32>
    %87 = arith.mulf %85, %86 : vector<1x128xf32>
    %88 = arith.addf %84, %87 : vector<1x128xf32>
    %89 = vector.extract_strided_slice %5 {offsets = [4, 0], sizes = [1, 256], strides = [1, 1]} : vector<8x256xf32> to vector<1x256xf32>
    %cst_22 = arith.constant dense<0.000000e+00> : vector<1x256xf32>
    %90 = tpu.matmul %88, %6, %cst_22 {dimension_numbers = #tpu.dot_dimension_numbers<[1], [0], [0], [1], [0, 0, 1, 1], [], []>} : vector<1x128xf32>, vector<128x256xf32>, vector<1x256xf32> -> vector<1x256xf32>
    %91 = vector.extract_strided_slice %89 {offsets = [0, 0], sizes = [1, 128], strides = [1, 1]} : vector<1x256xf32> to vector<1x128xf32>
    %92 = vector.extract_strided_slice %90 {offsets = [0, 0], sizes = [1, 128], strides = [1, 1]} : vector<1x256xf32> to vector<1x128xf32>
    %93 = arith.addf %91, %92 : vector<1x128xf32>
    %94 = arith.negf %93 : vector<1x128xf32>
    %95 = math.exp %94 : vector<1x128xf32>
    %cst_23 = arith.constant 1.000000e+00 : f32
    %96 = vector.broadcast %cst_23 : f32 to vector<1x128xf32>
    %97 = arith.addf %96, %95 : vector<1x128xf32>
    %98 = arith.divf %96, %97 : vector<1x128xf32>
    %99 = vector.extract_strided_slice %89 {offsets = [0, 128], sizes = [1, 128], strides = [1, 1]} : vector<1x256xf32> to vector<1x128xf32>
    %100 = vector.extract_strided_slice %90 {offsets = [0, 128], sizes = [1, 128], strides = [1, 1]} : vector<1x256xf32> to vector<1x128xf32>
    %101 = arith.addf %100, %7 : vector<1x128xf32>
    %102 = arith.mulf %98, %101 : vector<1x128xf32>
    %103 = arith.addf %99, %102 : vector<1x128xf32>
    %104 = math.tanh %103 : vector<1x128xf32>
    %c64_i32_24 = arith.constant 64 : i32
    %105 = tpu.dynamic_rotate %98 by %c64_i32_24 dim 1 : vector<1x128xf32>, i32 -> vector<1x128xf32>
    %106 = arith.subf %88, %104 : vector<1x128xf32>
    %107 = arith.mulf %105, %106 : vector<1x128xf32>
    %108 = arith.addf %104, %107 : vector<1x128xf32>
    %109 = vector.extract_strided_slice %5 {offsets = [5, 0], sizes = [1, 256], strides = [1, 1]} : vector<8x256xf32> to vector<1x256xf32>
    %cst_25 = arith.constant dense<0.000000e+00> : vector<1x256xf32>
    %110 = tpu.matmul %108, %6, %cst_25 {dimension_numbers = #tpu.dot_dimension_numbers<[1], [0], [0], [1], [0, 0, 1, 1], [], []>} : vector<1x128xf32>, vector<128x256xf32>, vector<1x256xf32> -> vector<1x256xf32>
    %111 = vector.extract_strided_slice %109 {offsets = [0, 0], sizes = [1, 128], strides = [1, 1]} : vector<1x256xf32> to vector<1x128xf32>
    %112 = vector.extract_strided_slice %110 {offsets = [0, 0], sizes = [1, 128], strides = [1, 1]} : vector<1x256xf32> to vector<1x128xf32>
    %113 = arith.addf %111, %112 : vector<1x128xf32>
    %114 = arith.negf %113 : vector<1x128xf32>
    %115 = math.exp %114 : vector<1x128xf32>
    %cst_26 = arith.constant 1.000000e+00 : f32
    %116 = vector.broadcast %cst_26 : f32 to vector<1x128xf32>
    %117 = arith.addf %116, %115 : vector<1x128xf32>
    %118 = arith.divf %116, %117 : vector<1x128xf32>
    %119 = vector.extract_strided_slice %109 {offsets = [0, 128], sizes = [1, 128], strides = [1, 1]} : vector<1x256xf32> to vector<1x128xf32>
    %120 = vector.extract_strided_slice %110 {offsets = [0, 128], sizes = [1, 128], strides = [1, 1]} : vector<1x256xf32> to vector<1x128xf32>
    %121 = arith.addf %120, %7 : vector<1x128xf32>
    %122 = arith.mulf %118, %121 : vector<1x128xf32>
    %123 = arith.addf %119, %122 : vector<1x128xf32>
    %124 = math.tanh %123 : vector<1x128xf32>
    %c64_i32_27 = arith.constant 64 : i32
    %125 = tpu.dynamic_rotate %118 by %c64_i32_27 dim 1 : vector<1x128xf32>, i32 -> vector<1x128xf32>
    %126 = arith.subf %108, %124 : vector<1x128xf32>
    %127 = arith.mulf %125, %126 : vector<1x128xf32>
    %128 = arith.addf %124, %127 : vector<1x128xf32>
    %129 = vector.extract_strided_slice %5 {offsets = [6, 0], sizes = [1, 256], strides = [1, 1]} : vector<8x256xf32> to vector<1x256xf32>
    %cst_28 = arith.constant dense<0.000000e+00> : vector<1x256xf32>
    %130 = tpu.matmul %128, %6, %cst_28 {dimension_numbers = #tpu.dot_dimension_numbers<[1], [0], [0], [1], [0, 0, 1, 1], [], []>} : vector<1x128xf32>, vector<128x256xf32>, vector<1x256xf32> -> vector<1x256xf32>
    %131 = vector.extract_strided_slice %129 {offsets = [0, 0], sizes = [1, 128], strides = [1, 1]} : vector<1x256xf32> to vector<1x128xf32>
    %132 = vector.extract_strided_slice %130 {offsets = [0, 0], sizes = [1, 128], strides = [1, 1]} : vector<1x256xf32> to vector<1x128xf32>
    %133 = arith.addf %131, %132 : vector<1x128xf32>
    %134 = arith.negf %133 : vector<1x128xf32>
    %135 = math.exp %134 : vector<1x128xf32>
    %cst_29 = arith.constant 1.000000e+00 : f32
    %136 = vector.broadcast %cst_29 : f32 to vector<1x128xf32>
    %137 = arith.addf %136, %135 : vector<1x128xf32>
    %138 = arith.divf %136, %137 : vector<1x128xf32>
    %139 = vector.extract_strided_slice %129 {offsets = [0, 128], sizes = [1, 128], strides = [1, 1]} : vector<1x256xf32> to vector<1x128xf32>
    %140 = vector.extract_strided_slice %130 {offsets = [0, 128], sizes = [1, 128], strides = [1, 1]} : vector<1x256xf32> to vector<1x128xf32>
    %141 = arith.addf %140, %7 : vector<1x128xf32>
    %142 = arith.mulf %138, %141 : vector<1x128xf32>
    %143 = arith.addf %139, %142 : vector<1x128xf32>
    %144 = math.tanh %143 : vector<1x128xf32>
    %c64_i32_30 = arith.constant 64 : i32
    %145 = tpu.dynamic_rotate %138 by %c64_i32_30 dim 1 : vector<1x128xf32>, i32 -> vector<1x128xf32>
    %146 = arith.subf %128, %144 : vector<1x128xf32>
    %147 = arith.mulf %145, %146 : vector<1x128xf32>
    %148 = arith.addf %144, %147 : vector<1x128xf32>
    %149 = vector.extract_strided_slice %5 {offsets = [7, 0], sizes = [1, 256], strides = [1, 1]} : vector<8x256xf32> to vector<1x256xf32>
    %cst_31 = arith.constant dense<0.000000e+00> : vector<1x256xf32>
    %150 = tpu.matmul %148, %6, %cst_31 {dimension_numbers = #tpu.dot_dimension_numbers<[1], [0], [0], [1], [0, 0, 1, 1], [], []>} : vector<1x128xf32>, vector<128x256xf32>, vector<1x256xf32> -> vector<1x256xf32>
    %151 = vector.extract_strided_slice %149 {offsets = [0, 0], sizes = [1, 128], strides = [1, 1]} : vector<1x256xf32> to vector<1x128xf32>
    %152 = vector.extract_strided_slice %150 {offsets = [0, 0], sizes = [1, 128], strides = [1, 1]} : vector<1x256xf32> to vector<1x128xf32>
    %153 = arith.addf %151, %152 : vector<1x128xf32>
    %154 = arith.negf %153 : vector<1x128xf32>
    %155 = math.exp %154 : vector<1x128xf32>
    %cst_32 = arith.constant 1.000000e+00 : f32
    %156 = vector.broadcast %cst_32 : f32 to vector<1x128xf32>
    %157 = arith.addf %156, %155 : vector<1x128xf32>
    %158 = arith.divf %156, %157 : vector<1x128xf32>
    %159 = vector.extract_strided_slice %149 {offsets = [0, 128], sizes = [1, 128], strides = [1, 1]} : vector<1x256xf32> to vector<1x128xf32>
    %160 = vector.extract_strided_slice %150 {offsets = [0, 128], sizes = [1, 128], strides = [1, 1]} : vector<1x256xf32> to vector<1x128xf32>
    %161 = arith.addf %160, %7 : vector<1x128xf32>
    %162 = arith.mulf %158, %161 : vector<1x128xf32>
    %163 = arith.addf %159, %162 : vector<1x128xf32>
    %164 = math.tanh %163 : vector<1x128xf32>
    %c64_i32_33 = arith.constant 64 : i32
    %165 = tpu.dynamic_rotate %158 by %c64_i32_33 dim 1 : vector<1x128xf32>, i32 -> vector<1x128xf32>
    %166 = arith.subf %148, %164 : vector<1x128xf32>
    %167 = arith.mulf %165, %166 : vector<1x128xf32>
    %168 = arith.addf %164, %167 : vector<1x128xf32>
    %c0_34 = arith.constant 0 : index
    %c0_35 = arith.constant 0 : index
    %169 = vector.load %arg9[%c0_34, %c0_35] : memref<1x128xf32, #tpu.memory_space<vmem>>, vector<1x128xf32>
    tpu.vector_store %arg9[%c0_34, %c0_35], %168 {strides = array<i32>} : memref<1x128xf32, #tpu.memory_space<vmem>>, vector<1x128xf32>,
    %c0_36 = arith.constant 0 : index
    %c0_37 = arith.constant 0 : index
    %170 = vector.load %arg6[%c0_36, %c0_37] : memref<128x128xf32, #tpu.memory_space<vmem>>, vector<128x128xf32>
    %cst_38 = arith.constant dense<0.000000e+00> : vector<1x128xf32>
    %171 = tpu.matmul %168, %170, %cst_38 {dimension_numbers = #tpu.dot_dimension_numbers<[1], [0], [0], [1], [0, 0, 1, 1], [], []>} : vector<1x128xf32>, vector<128x128xf32>, vector<1x128xf32> -> vector<1x128xf32>
    %c0_39 = arith.constant 0 : index
    %c0_40 = arith.constant 0 : index
    %172 = vector.load %arg7[%c0_39, %c0_40] : memref<1x128xf32, #tpu.memory_space<vmem>>, vector<1x128xf32>
    %173 = arith.addf %171, %172 : vector<1x128xf32>
    %cst_41 = arith.constant dense<0xFF800000> : vector<1xf32>
    %174 = vector.multi_reduction <maximumf>, %173, %cst_41 [1] : vector<1x128xf32> to vector<1xf32>
    %175 = vector.shape_cast %174 : vector<1xf32> to vector<1x1xf32>
    %176 = vector.broadcast %175 : vector<1x1xf32> to vector<1x128xf32>
    %177 = arith.subf %173, %176 : vector<1x128xf32>
    %178 = math.exp %177 : vector<1x128xf32>
    %cst_42 = arith.constant dense<0.000000e+00> : vector<1xf32>
    %179 = vector.multi_reduction <add>, %178, %cst_42 [1] : vector<1x128xf32> to vector<1xf32>
    %180 = vector.shape_cast %179 : vector<1xf32> to vector<1x1xf32>
    %181 = math.log %180 : vector<1x1xf32>
    %182 = vector.broadcast %181 : vector<1x1xf32> to vector<1x128xf32>
    %183 = arith.subf %177, %182 : vector<1x128xf32>
    %c0_43 = arith.constant 0 : index
    %c0_44 = arith.constant 0 : index
    %184 = vector.load %arg8[%c0_43, %c0_44] : memref<1x128xf32, #tpu.memory_space<vmem>>, vector<1x128xf32>
    tpu.vector_store %arg8[%c0_43, %c0_44], %183 {strides = array<i32>} : memref<1x128xf32, #tpu.memory_space<vmem>>, vector<1x128xf32>,
    return
  }
}

</mosaic_0001>

<llo_original>
// kernel: gru_light_forward.1
$region0: #{gru_light_forward.1}
  #allocation0 [shape = 'u32[]', space=smem, size = 0x4, offset = 0x4, fixed_abs, tag = 'smem constant byte address 0x4 - core index']
  #allocation1 [shape = 'u32[144,128]{1,0:T(1,128)}', space=vmem, size = 0x12000, scoped, tag = 'internal scratch']
  %s0 = inlined_call_operand.vmem [shape: f32[8,32], index: 0, kind: input, shape index: {}]
  %s1 = inlined_call_operand.vmem [shape: f32[1,128], index: 1, kind: input, shape index: {}]
  %s2 = inlined_call_operand.vmem [shape: f32[32,256], index: 2, kind: input, shape index: {}]
  %s3 = inlined_call_operand.hbm [shape: f32[128,256], index: 3, kind: input, shape index: {}]
  %s4 = inlined_call_operand.vmem [shape: f32[1,256], index: 4, kind: input, shape index: {}]
  %s5 = inlined_call_operand.vmem [shape: f32[1,128], index: 5, kind: input, shape index: {}]
  %s6 = inlined_call_operand.hbm [shape: f32[128,128], index: 6, kind: input, shape index: {}]
  %s7 = inlined_call_operand.vmem [shape: f32[1,128], index: 7, kind: input, shape index: {}]
  %s8 = inlined_call_operand.hbm [shape: f32[1,128], index: 8, kind: output, shape index: {0}]
  %s9 = inlined_call_operand.vmem [shape: f32[1,128], index: 9, kind: output, shape index: {1}]
  %10 = xla_tuple %s8, %s9
  %s11 = sld [smem:[#allocation0]]
  $region58: #{gru_light_forward.1} parent=0
    _
  %s13 = ssub.s32 1, %s11
  %s14 = scalar_select 0, %s13, %s11
  $region1: #{gru_light_forward.1} parent=0
    #allocation2 [shape = 'u8[131072]{0}', space=vmem, size = 0x20000, scoped, tag = 'input window, operand 3, single buffered']
    #allocation3 [shape = 's32[1]{0}', space=sflag, size = 0x4, scoped, tag = 'scoped memory for gru_light_forward.1']
    #allocation4 [shape = 's32[1]{0}', space=sflag, size = 0x4, scoped, tag = 'scoped memory for gru_light_forward.1']
    #allocation5 [shape = 'u8[65536]{0}', space=vmem, size = 0x10000, scoped, tag = 'input window, operand 6, single buffered']
    #allocation6 [shape = 's32[1]{0}', space=sflag, size = 0x4, scoped, tag = 'scoped memory for gru_light_forward.1']
    #allocation7 [shape = 'u8[512]{0}', space=vmem, size = 0x400, scoped, tag = 'output window, operand 0, single buffered']
    %15 = vsyncpa [#allocation3], 0
    %16 = vsyncpa [#allocation6], 0
    %17 = vsyncpa [#allocation4], 0
    // Predicated region
    $region2: #{gru_light_forward.1} parent=1 // pred_check
      _
    $region3: #{gru_light_forward.1} parent=1 // pred_check_branch
      %19 = sbr.rel (0) target = $region5
    $region4: #{gru_light_forward.1} parent=1 // pred_region
      _
    $region5: #{gru_light_forward.1} parent=1 // pred_fallthru
      _
    // Predicated region
    $region6: #{gru_light_forward.1} parent=1 // pred_check
      _
    $region7: #{gru_light_forward.1} parent=1 // pred_check_branch
      %21 = sbr.rel (0) target = $region9
    $region8: #{gru_light_forward.1} parent=1 // pred_region
      _
    $region9: #{gru_light_forward.1} parent=1 // pred_fallthru
      _
    // Predicated region
    $region10: #{gru_light_forward.1} parent=1 // pred_check
      _
    $region11: #{gru_light_forward.1} parent=1 // pred_check_branch
      %23 = sbr.rel (0) target = $region13
    $region12: #{gru_light_forward.1} parent=1 // pred_region
      _
    $region13: #{gru_light_forward.1} parent=1 // pred_fallthru
      _
    // Predicated region
    $region14: #{gru_light_forward.1} parent=1 // pred_check
      _
    $region15: #{gru_light_forward.1} parent=1 // pred_check_branch
      %25 = sbr.rel (0) target = $region17
    $region16: #{gru_light_forward.1} parent=1 // pred_region
      %s27 = ssub.s32 4096, 4096
      %28 = vsyncadd [#allocation3], %s27
      %s29 = sshll.u32 [#allocation2], 4
      %s30 = int_to_ptr.vmem [resolvable:$true] %s29
      %35 = dma.hbm_to_vmem [thread:$0]  %s3, 4096, %s30, [#allocation3], 256, 256, 16
    $region17: #{gru_light_forward.1} parent=1 // pred_fallthru
      _
    // Predicated region
    $region18: #{gru_light_forward.1} parent=1 // pred_check
      _
    $region19: #{gru_light_forward.1} parent=1 // pred_check_branch
      %37 = sbr.rel (0) target = $region21
    $region20: #{gru_light_forward.1} parent=1 // pred_region
      _
    $region21: #{gru_light_forward.1} parent=1 // pred_fallthru
      _
    // Predicated region
    $region22: #{gru_light_forward.1} parent=1 // pred_check
      _
    $region23: #{gru_light_forward.1} parent=1 // pred_check_branch
      %39 = sbr.rel (0) target = $region25
    $region24: #{gru_light_forward.1} parent=1 // pred_region
      _
    $region25: #{gru_light_forward.1} parent=1 // pred_fallthru
      _
    // Predicated region
    $region26: #{gru_light_forward.1} parent=1 // pred_check
      _
    $region27: #{gru_light_forward.1} parent=1 // pred_check_branch
      %41 = sbr.rel (0) target = $region29
    $region28: #{gru_light_forward.1} parent=1 // pred_region
      %s43 = ssub.s32 2048, 2048
      %44 = vsyncadd [#allocation6], %s43
      %s45 = sshll.u32 [#allocation5], 4
      %s46 = int_to_ptr.vmem [resolvable:$true] %s45
      %51 = dma.hbm_to_vmem [thread:$0]  %s6, 2048, %s46, [#allocation6], 128, 128, 8
    $region29: #{gru_light_forward.1} parent=1 // pred_fallthru
      _
    // Predicated region
    $region30: #{gru_light_forward.1} parent=1 // pred_check
      _
    $region31: #{gru_light_forward.1} parent=1 // pred_check_branch
      %53 = sbr.rel (0) target = $region33
    $region32: #{gru_light_forward.1} parent=1 // pred_region
      _
    $region33: #{gru_light_forward.1} parent=1 // pred_fallthru
      _
    // Predicated region
    $region34: #{gru_light_forward.1} parent=1 // pred_check
      _
    $region35: #{gru_light_forward.1} parent=1 // pred_check_branch
      %55 = sbr.rel (0) target = $region37
    $region36: #{gru_light_forward.1} parent=1 // pred_region
      %56 = dma.done [#allocation3], 4096
    $region37: #{gru_light_forward.1} parent=1 // pred_fallthru
      _
    // Predicated region
    $region38: #{gru_light_forward.1} parent=1 // pred_check
      _
    $region39: #{gru_light_forward.1} parent=1 // pred_check_branch
      %58 = sbr.rel (0) target = $region41
    $region40: #{gru_light_forward.1} parent=1 // pred_region
      %59 = dma.done [#allocation6], 2048
    $region41: #{gru_light_forward.1} parent=1 // pred_fallthru
      _
    %v60 = vld [vmem:[%s0] sm:$0xff]
    %v61 = vld [vmem:[%s2] sm:$0xff]
    %v62 = vld [vmem:[%s2 + $0x8] sm:$0xff]
    %v63 = vld [vmem:[%s2 + $0x10] sm:$0xff]
    %v64 = vld [vmem:[%s2 + $0x18] sm:$0xff]
    %v65 = vld [vmem:[%s2 + $0x20] sm:$0xff]
    %v66 = vld [vmem:[%s2 + $0x28] sm:$0xff]
    %v67 = vld [vmem:[%s2 + $0x30] sm:$0xff]
    %v68 = vld [vmem:[%s2 + $0x38] sm:$0xff]
    %v69 = vld [vmem:[%s4] sm:$0x3]
    %v71 = vlaneseq
    %v72 = vshrl.u32 %v71, 7
    %v73 = vsub.s32 0, %v72
    %v74 = vrot.slane %v69, %v73
    %v75 = vlaneseq
    %v76 = vshrl.u32 %v75, 7
    %v77 = vsub.s32 1, %v76
    %v78 = vrot.slane %v69, %v77
    %vm81 = vcmask 261120
    %v83 = vsel %vm81, %v60, 0
    %85 = vmatprep.subr.mxu0 %v62
    %86 = vmatpush1.msra.mxu0 %v61
    %87 = vmatprep.subr.mxu0 %v64
    %88 = vmatpush1.msra.mxu0 %v63
    %89 = vmatprep.subr.mxu0 %v66
    %90 = vmatpush1.msra.mxu0 %v65
    %91 = vmatprep.subr.mxu0 %v68
    %92 = vmatpush1.msra.mxu0 %v67
    %93 = vmatprep.subr.mxu0 0.0
    %94 = vmatpush1.msra.mxu0 0.0
    %95 = vmatprep.subr.mxu0 0.0
    %96 = vmatpush1.msra.mxu0 0.0
    %97 = vmatprep.subr.mxu0 0.0
    %98 = vmatpush1.msra.mxu0 0.0
    %99 = vmatprep.subr.mxu0 0.0
    %100 = vmatpush1.msra.mxu0 0.0
    %101 = vmatprep.subr.mxu0 0.0
    %102 = vmatpush1.msra.mxu0 0.0
    %103 = vmatprep.subr.mxu0 0.0
    %104 = vmatpush1.msra.mxu0 0.0
    %105 = vmatprep.subr.mxu0 0.0
    %106 = vmatpush1.msra.mxu0 0.0
    %107 = vmatprep.subr.mxu0 0.0
    %108 = vmatpush1.msra.mxu0 0.0
    %109 = vmatprep.subr.mxu0 0.0
    %110 = vmatpush1.msra.mxu0 0.0
    %111 = vmatprep.subr.mxu0 0.0
    %112 = vmatpush1.msra.mxu0 0.0
    %113 = vmatprep.subr.mxu0 0.0
    %114 = vmatpush1.msra.mxu0 0.0
    %115 = vmatprep.subr.mxu0 0.0
    %116 = vmatpush1.msra.mxu0 0.0
    %117 = vmatprep.subr.mxu0 0.0
    %118 = vmatpush1.msra.mxu0 0.0
    %119 = vmatprep.subr.mxu0 0.0
    %120 = vmatpush1.msra.mxu0 0.0
    %121 = vmatprep.subr.mxu0 0.0
    %122 = vmatpush1.msra.mxu0 0.0
    %123 = vmatprep.subr.mxu0 0.0
    %124 = vmatpush1.msra.mxu0 0.0
    %125 = vmatprep.subr.mxu0 0.0
    %126 = vmatpush1.msra.mxu0 0.0
    %127 = vmatprep.subr.mxu0 0.0
    %128 = vmatpush1.msra.mxu0 0.0
    %129 = vmatprep.subr.mxu0 0.0
    %130 = vmatpush1.msra.mxu0 0.0
    %131 = vmatprep.subr.mxu0 0.0
    %132 = vmatpush1.msra.mxu0 0.0
    %133 = vmatprep.subr.mxu0 0.0
    %134 = vmatpush1.msra.mxu0 0.0
    %135 = vmatprep.subr.mxu0 0.0
    %136 = vmatpush1.msra.mxu0 0.0
    %137 = vmatprep.subr.mxu0 0.0
    %138 = vmatpush1.msra.mxu0 0.0
    %139 = vmatprep.subr.mxu0 0.0
    %140 = vmatpush1.msra.mxu0 0.0
    %141 = vmatprep.subr.mxu0 0.0
    %142 = vmatpush1.msra.mxu0 0.0
    %143 = vmatprep.subr.mxu0 0.0
    %144 = vmatpush1.msra.mxu0 0.0
    %145 = vmatprep.subr.mxu0 0.0
    %146 = vmatpush1.msra.mxu0 0.0
    %147 = vmatprep.subr.mxu0 0.0
    %148 = vmatpush1.msra.mxu0 0.0
    %149 = vmatprep.mubr.f32.mxu0 0.0
    %150 = vmatmul.mubr.f32.gmra.mrb[0].mxu0 %v83
    %v151 = vpop.f32.mrb[0].mxu0
    %v152 = vadd.f32 %v74, %v151
    %v153 = vpop.f32.mrb[0].mxu0
    %v154 = vadd.f32 %v78, %v153
    %155 = vdwg.mxu0
    %v156 = vld [vmem:[#allocation2] sm:$0xff]
    %v157 = vld [vmem:[#allocation2 + $0x8] sm:$0xff]
    %v158 = vld [vmem:[#allocation2 + $0x10] sm:$0xff]
    %v159 = vld [vmem:[#allocation2 + $0x18] sm:$0xff]
    %v160 = vld [vmem:[#allocation2 + $0x20] sm:$0xff]
    %v161 = vld [vmem:[#allocation2 + $0x28] sm:$0xff]
    %v162 = vld [vmem:[#allocation2 + $0x30] sm:$0xff]
    %v163 = vld [vmem:[#allocation2 + $0x38] sm:$0xff]
    %v164 = vld [vmem:[#allocation2 + $0x40] sm:$0xff]
    %v165 = vld [vmem:[#allocation2 + $0x48] sm:$0xff]
    %v166 = vld [vmem:[#allocation2 + $0x50] sm:$0xff]
    %v167 = vld [vmem:[#allocation2 + $0x58] sm:$0xff]
    %v168 = vld [vmem:[#allocation2 + $0x60] sm:$0xff]
    %v169 = vld [vmem:[#allocation2 + $0x68] sm:$0xff]
    %v170 = vld [vmem:[#allocation2 + $0x70] sm:$0xff]
    %v171 = vld [vmem:[#allocation2 + $0x78] sm:$0xff]
    %v172 = vld [vmem:[#allocation2 + $0x80] sm:$0xff]
    %v173 = vld [vmem:[#allocation2 + $0x88] sm:$0xff]
    %v174 = vld [vmem:[#allocation2 + $0x90] sm:$0xff]
    %v175 = vld [vmem:[#allocation2 + $0x98] sm:$0xff]
    %v176 = vld [vmem:[#allocation2 + $0xa0] sm:$0xff]
    %v177 = vld [vmem:[#allocation2 + $0xa8] sm:$0xff]
    %v178 = vld [vmem:[#allocation2 + $0xb0] sm:$0xff]
    %v179 = vld [vmem:[#allocation2 + $0xb8] sm:$0xff]
    %v180 = vld [vmem:[#allocation2 + $0xc0] sm:$0xff]
    %v181 = vld [vmem:[#allocation2 + $0xc8] sm:$0xff]
    %v182 = vld [vmem:[#allocation2 + $0xd0] sm:$0xff]
    %v183 = vld [vmem:[#allocation2 + $0xd8] sm:$0xff]
    %v184 = vld [vmem:[#allocation2 + $0xe0] sm:$0xff]
    %v185 = vld [vmem:[#allocation2 + $0xe8] sm:$0xff]
    %v186 = vld [vmem:[#allocation2 + $0xf0] sm:$0xff]
    %v187 = vld [vmem:[#allocation2 + $0xf8] sm:$0xff]
    %v188 = vld [vmem:[%s5] sm:$0x1]
    %v189 = vld [vmem:[%s1] sm:$0x1]
    %190 = vmatprep.subr.mxu0 %v157
    %191 = vmatpush1.msra.mxu0 %v156
    %192 = vmatprep.subr.mxu0 %v159
    %193 = vmatpush1.msra.mxu0 %v158
    %194 = vmatprep.subr.mxu0 %v161
    %195 = vmatpush1.msra.mxu0 %v160
    %196 = vmatprep.subr.mxu0 %v163
    %197 = vmatpush1.msra.mxu0 %v162
    %198 = vmatprep.subr.mxu0 %v165
    %199 = vmatpush1.msra.mxu0 %v164
    %200 = vmatprep.subr.mxu0 %v167
    %201 = vmatpush1.msra.mxu0 %v166
    %202 = vmatprep.subr.mxu0 %v169
    %203 = vmatpush1.msra.mxu0 %v168
    %204 = vmatprep.subr.mxu0 %v171
    %205 = vmatpush1.msra.mxu0 %v170
    %206 = vmatprep.subr.mxu0 %v173
    %207 = vmatpush1.msra.mxu0 %v172
    %208 = vmatprep.subr.mxu0 %v175
    %209 = vmatpush1.msra.mxu0 %v174
    %210 = vmatprep.subr.mxu0 %v177
    %211 = vmatpush1.msra.mxu0 %v176
    %212 = vmatprep.subr.mxu0 %v179
    %213 = vmatpush1.msra.mxu0 %v178
    %214 = vmatprep.subr.mxu0 %v181
    %215 = vmatpush1.msra.mxu0 %v180
    %216 = vmatprep.subr.mxu0 %v183
    %217 = vmatpush1.msra.mxu0 %v182
    %218 = vmatprep.subr.mxu0 %v185
    %219 = vmatpush1.msra.mxu0 %v184
    %220 = vmatprep.subr.mxu0 %v187
    %221 = vmatpush1.msra.mxu0 %v186
    %222 = vmatprep.subr.mxu0 0.0
    %223 = vmatpush1.msra.mxu0 0.0
    %224 = vmatprep.subr.mxu0 0.0
    %225 = vmatpush1.msra.mxu0 0.0
    %226 = vmatprep.subr.mxu0 0.0
    %227 = vmatpush1.msra.mxu0 0.0
    %228 = vmatprep.subr.mxu0 0.0
    %229 = vmatpush1.msra.mxu0 0.0
    %230 = vmatprep.subr.mxu0 0.0
    %231 = vmatpush1.msra.mxu0 0.0
    %232 = vmatprep.subr.mxu0 0.0
    %233 = vmatpush1.msra.mxu0 0.0
    %234 = vmatprep.subr.mxu0 0.0
    %235 = vmatpush1.msra.mxu0 0.0
    %236 = vmatprep.subr.mxu0 0.0
    %237 = vmatpush1.msra.mxu0 0.0
    %238 = vmatprep.subr.mxu0 0.0
    %239 = vmatpush1.msra.mxu0 0.0
    %240 = vmatprep.subr.mxu0 0.0
    %241 = vmatpush1.msra.mxu0 0.0
    %242 = vmatprep.subr.mxu0 0.0
    %243 = vmatpush1.msra.mxu0 0.0
    %244 = vmatprep.subr.mxu0 0.0
    %245 = vmatpush1.msra.mxu0 0.0
    %246 = vmatprep.subr.mxu0 0.0
    %247 = vmatpush1.msra.mxu0 0.0
    %248 = vmatprep.subr.mxu0 0.0
    %249 = vmatpush1.msra.mxu0 0.0
    %250 = vmatprep.subr.mxu0 0.0
    %251 = vmatpush1.msra.mxu0 0.0
    %252 = vmatprep.subr.mxu0 0.0
    %253 = vmatpush1.msra.mxu0 0.0
    %254 = vmatprep.mubr.f32.mxu0 0.0
    %255 = vmatmul.mubr.f32.gmra.mrb[0].mxu0 %v189
    %v256 = vpop.f32.mrb[0].mxu0
    %v257 = vadd.f32 0.0, %v256
    %v258 = vpop.f32.mrb[0].mxu0
    %v259 = vadd.f32 0.0, %v258
    %260 = vdwg.mxu0
    %v261 = vadd.f32 %v152, %v257
    %v262 = vxor.u32 %v261, 2147483648
    %v263 = vmul.f32 %v262, 1.442695
    %v264 = vpow.pop %v263
    %v265 = vadd.f32 %v264, 1.0
    %v266 = vrcp.pop %v265
    %v267 = vmul.f32 1.0, %v266
    %v268 = vadd.f32 %v259, %v188
    %v269 = vmul.f32 %v267, %v268
    %v270 = vadd.f32 %v154, %v269
    %v271 = vtanh.pop %v270
    %272 = vrot.lane.b32.xlu0 %v267, 64
    %v273 = vpop.permute.xlu0 %272
    %v274 = vsub.f32 %v189, %v271
    %v275 = vmul.f32 %v273, %v274
    %v276 = vadd.f32 %v271, %v275
    %277 = vmatprep.subr.mxu0 %v157
    %278 = vmatpush1.msra.mxu0 %v156
    %279 = vmatprep.subr.mxu0 %v159
    %280 = vmatpush1.msra.mxu0 %v158
    %281 = vmatprep.subr.mxu0 %v161
    %282 = vmatpush1.msra.mxu0 %v160
    %283 = vmatprep.subr.mxu0 %v163
    %284 = vmatpush1.msra.mxu0 %v162
    %285 = vmatprep.subr.mxu0 %v165
    %286 = vmatpush1.msra.mxu0 %v164
    %287 = vmatprep.subr.mxu0 %v167
    %288 = vmatpush1.msra.mxu0 %v166
    %289 = vmatprep.subr.mxu0 %v169
    %290 = vmatpush1.msra.mxu0 %v168
    %291 = vmatprep.subr.mxu0 %v171
    %292 = vmatpush1.msra.mxu0 %v170
    %293 = vmatprep.subr.mxu0 %v173
    %294 = vmatpush1.msra.mxu0 %v172
    %295 = vmatprep.subr.mxu0 %v175
    %296 = vmatpush1.msra.mxu0 %v174
    %297 = vmatprep.subr.mxu0 %v177
    %298 = vmatpush1.msra.mxu0 %v176
    %299 = vmatprep.subr.mxu0 %v179
    %300 = vmatpush1.msra.mxu0 %v178
    %301 = vmatprep.subr.mxu0 %v181
    %302 = vmatpush1.msra.mxu0 %v180
    %303 = vmatprep.subr.mxu0 %v183
    %304 = vmatpush1.msra.mxu0 %v182
    %305 = vmatprep.subr.mxu0 %v185
    %306 = vmatpush1.msra.mxu0 %v184
    %307 = vmatprep.subr.mxu0 %v187
    %308 = vmatpush1.msra.mxu0 %v186
    %309 = vmatprep.subr.mxu0 0.0
    %310 = vmatpush1.msra.mxu0 0.0
    %311 = vmatprep.subr.mxu0 0.0
    %312 = vmatpush1.msra.mxu0 0.0
    %313 = vmatprep.subr.mxu0 0.0
    %314 = vmatpush1.msra.mxu0 0.0
    %315 = vmatprep.subr.mxu0 0.0
    %316 = vmatpush1.msra.mxu0 0.0
    %317 = vmatprep.subr.mxu0 0.0
    %318 = vmatpush1.msra.mxu0 0.0
    %319 = vmatprep.subr.mxu0 0.0
    %320 = vmatpush1.msra.mxu0 0.0
    %321 = vmatprep.subr.mxu0 0.0
    %322 = vmatpush1.msra.mxu0 0.0
    %323 = vmatprep.subr.mxu0 0.0
    %324 = vmatpush1.msra.mxu0 0.0
    %325 = vmatprep.subr.mxu0 0.0
    %326 = vmatpush1.msra.mxu0 0.0
    %327 = vmatprep.subr.mxu0 0.0
    %328 = vmatpush1.msra.mxu0 0.0
    %329 = vmatprep.subr.mxu0 0.0
    %330 = vmatpush1.msra.mxu0 0.0
    %331 = vmatprep.subr.mxu0 0.0
    %332 = vmatpush1.msra.mxu0 0.0
    %333 = vmatprep.subr.mxu0 0.0
    %334 = vmatpush1.msra.mxu0 0.0
    %335 = vmatprep.subr.mxu0 0.0
    %336 = vmatpush1.msra.mxu0 0.0
    %337 = vmatprep.subr.mxu0 0.0
    %338 = vmatpush1.msra.mxu0 0.0
    %339 = vmatprep.subr.mxu0 0.0
    %340 = vmatpush1.msra.mxu0 0.0
    %341 = vmatprep.mubr.f32.mxu0 0.0
    %342 = vmatmul.mubr.f32.gmra.mrb[0].mxu0 %v276
    %v343 = vpop.f32.mrb[0].mxu0
    %v344 = vadd.f32 0.0, %v343
    %v345 = vpop.f32.mrb[0].mxu0
    %v346 = vadd.f32 0.0, %v345
    %347 = vdwg.mxu0
    %v349 = vrot.slane %v344, 7
    %v351 = vadd.f32 %v152, %v349
    %v352 = vxor.u32 %v351, 2147483648
    %v353 = vmul.f32 %v352, 1.442695
    %v354 = vpow.pop %v353
    %v355 = vadd.f32 %v354, 1.0
    %v356 = vrcp.pop %v355
    %v357 = vmul.f32 1.0, %v356
    %v358 = vadd.f32 %v346, %v188
    %v360 = vrot.slane %v358, 7
    %v362 = vmul.f32 %v357, %v360
    %v363 = vadd.f32 %v154, %v362
    %v364 = vtanh.pop %v363
    %v366 = vrot.slane %v357, 1
    %368 = vrot.lane.b32.xlu0 %v366, 64
    %v369 = vpop.permute.xlu0 %368
    %v371 = vrot.slane %v364, 1
    %v373 = vsub.f32 %v276, %v371
    %v374 = vmul.f32 %v369, %v373
    %v376 = vrot.slane %v374, 7
    %v378 = vadd.f32 %v364, %v376
    %v380 = vrot.slane %v378, 1
    %382 = vmatprep.subr.mxu0 %v157
    %383 = vmatpush1.msra.mxu0 %v156
    %384 = vmatprep.subr.mxu0 %v159
    %385 = vmatpush1.msra.mxu0 %v158
    %386 = vmatprep.subr.mxu0 %v161
    %387 = vmatpush1.msra.mxu0 %v160
    %388 = vmatprep.subr.mxu0 %v163
    %389 = vmatpush1.msra.mxu0 %v162
    %390 = vmatprep.subr.mxu0 %v165
    %391 = vmatpush1.msra.mxu0 %v164
    %392 = vmatprep.subr.mxu0 %v167
    %393 = vmatpush1.msra.mxu0 %v166
    %394 = vmatprep.subr.mxu0 %v169
    %395 = vmatpush1.msra.mxu0 %v168
    %396 = vmatprep.subr.mxu0 %v171
    %397 = vmatpush1.msra.mxu0 %v170
    %398 = vmatprep.subr.mxu0 %v173
    %399 = vmatpush1.msra.mxu0 %v172
    %400 = vmatprep.subr.mxu0 %v175
    %401 = vmatpush1.msra.mxu0 %v174
    %402 = vmatprep.subr.mxu0 %v177
    %403 = vmatpush1.msra.mxu0 %v176
    %404 = vmatprep.subr.mxu0 %v179
    %405 = vmatpush1.msra.mxu0 %v178
    %406 = vmatprep.subr.mxu0 %v181
    %407 = vmatpush1.msra.mxu0 %v180
    %408 = vmatprep.subr.mxu0 %v183
    %409 = vmatpush1.msra.mxu0 %v182
    %410 = vmatprep.subr.mxu0 %v185
    %411 = vmatpush1.msra.mxu0 %v184
    %412 = vmatprep.subr.mxu0 %v187
    %413 = vmatpush1.msra.mxu0 %v186
    %414 = vmatprep.subr.mxu0 0.0
    %415 = vmatpush1.msra.mxu0 0.0
    %416 = vmatprep.subr.mxu0 0.0
    %417 = vmatpush1.msra.mxu0 0.0
    %418 = vmatprep.subr.mxu0 0.0
    %419 = vmatpush1.msra.mxu0 0.0
    %420 = vmatprep.subr.mxu0 0.0
    %421 = vmatpush1.msra.mxu0 0.0
    %422 = vmatprep.subr.mxu0 0.0
    %423 = vmatpush1.msra.mxu0 0.0
    %424 = vmatprep.subr.mxu0 0.0
    %425 = vmatpush1.msra.mxu0 0.0
    %426 = vmatprep.subr.mxu0 0.0
    %427 = vmatpush1.msra.mxu0 0.0
    %428 = vmatprep.subr.mxu0 0.0
    %429 = vmatpush1.msra.mxu0 0.0
    %430 = vmatprep.subr.mxu0 0.0
    %431 = vmatpush1.msra.mxu0 0.0
    %432 = vmatprep.subr.mxu0 0.0
    %433 = vmatpush1.msra.mxu0 0.0
    %434 = vmatprep.subr.mxu0 0.0
    %435 = vmatpush1.msra.mxu0 0.0
    %436 = vmatprep.subr.mxu0 0.0
    %437 = vmatpush1.msra.mxu0 0.0
    %438 = vmatprep.subr.mxu0 0.0
    %439 = vmatpush1.msra.mxu0 0.0
    %440 = vmatprep.subr.mxu0 0.0
    %441 = vmatpush1.msra.mxu0 0.0
    %442 = vmatprep.subr.mxu0 0.0
    %443 = vmatpush1.msra.mxu0 0.0
    %444 = vmatprep.subr.mxu0 0.0
    %445 = vmatpush1.msra.mxu0 0.0
    %446 = vmatprep.mubr.f32.mxu0 0.0
    %447 = vmatmul.mubr.f32.gmra.mrb[0].mxu0 %v380
    %v448 = vpop.f32.mrb[0].mxu0
    %v449 = vadd.f32 0.0, %v448
    %v450 = vpop.f32.mrb[0].mxu0
    %v451 = vadd.f32 0.0, %v450
    %452 = vdwg.mxu0
    %v454 = vrot.slane %v449, 6
    %v456 = vadd.f32 %v152, %v454
    %v457 = vxor.u32 %v456, 2147483648
    %v458 = vmul.f32 %v457, 1.442695
    %v459 = vpow.pop %v458
    %v460 = vadd.f32 %v459, 1.0
    %v461 = vrcp.pop %v460
    %v462 = vmul.f32 1.0, %v461
    %v463 = vadd.f32 %v451, %v188
    %v465 = vrot.slane %v463, 6
    %v467 = vmul.f32 %v462, %v465
    %v468 = vadd.f32 %v154, %v467
    %v469 = vtanh.pop %v468
    %v471 = vrot.slane %v462, 2
    %473 = vrot.lane.b32.xlu0 %v471, 64
    %v474 = vpop.permute.xlu0 %473
    %v476 = vrot.slane %v469, 1
    %v478 = vsub.f32 %v378, %v476
    %v480 = vrot.slane %v478, 1
    %v482 = vmul.f32 %v474, %v480
    %v484 = vrot.slane %v482, 6
    %v486 = vadd.f32 %v469, %v484
    %v488 = vrot.slane %v486, 2
    %490 = vmatprep.subr.mxu0 %v157
    %491 = vmatpush1.msra.mxu0 %v156
    %492 = vmatprep.subr.mxu0 %v159
    %493 = vmatpush1.msra.mxu0 %v158
    %494 = vmatprep.subr.mxu0 %v161
    %495 = vmatpush1.msra.mxu0 %v160
    %496 = vmatprep.subr.mxu0 %v163
    %497 = vmatpush1.msra.mxu0 %v162
    %498 = vmatprep.subr.mxu0 %v165
    %499 = vmatpush1.msra.mxu0 %v164
    %500 = vmatprep.subr.mxu0 %v167
    %501 = vmatpush1.msra.mxu0 %v166
    %502 = vmatprep.subr.mxu0 %v169
    %503 = vmatpush1.msra.mxu0 %v168
    %504 = vmatprep.subr.mxu0 %v171
    %505 = vmatpush1.msra.mxu0 %v170
    %506 = vmatprep.subr.mxu0 %v173
    %507 = vmatpush1.msra.mxu0 %v172
    %508 = vmatprep.subr.mxu0 %v175
    %509 = vmatpush1.msra.mxu0 %v174
    %510 = vmatprep.subr.mxu0 %v177
    %511 = vmatpush1.msra.mxu0 %v176
    %512 = vmatprep.subr.mxu0 %v179
    %513 = vmatpush1.msra.mxu0 %v178
    %514 = vmatprep.subr.mxu0 %v181
    %515 = vmatpush1.msra.mxu0 %v180
    %516 = vmatprep.subr.mxu0 %v183
    %517 = vmatpush1.msra.mxu0 %v182
    %518 = vmatprep.subr.mxu0 %v185
    %519 = vmatpush1.msra.mxu0 %v184
    %520 = vmatprep.subr.mxu0 %v187
    %521 = vmatpush1.msra.mxu0 %v186
    %522 = vmatprep.subr.mxu0 0.0
    %523 = vmatpush1.msra.mxu0 0.0
    %524 = vmatprep.subr.mxu0 0.0
    %525 = vmatpush1.msra.mxu0 0.0
    %526 = vmatprep.subr.mxu0 0.0
    %527 = vmatpush1.msra.mxu0 0.0
    %528 = vmatprep.subr.mxu0 0.0
    %529 = vmatpush1.msra.mxu0 0.0
    %530 = vmatprep.subr.mxu0 0.0
    %531 = vmatpush1.msra.mxu0 0.0
    %532 = vmatprep.subr.mxu0 0.0
    %533 = vmatpush1.msra.mxu0 0.0
    %534 = vmatprep.subr.mxu0 0.0
    %535 = vmatpush1.msra.mxu0 0.0
    %536 = vmatprep.subr.mxu0 0.0
    %537 = vmatpush1.msra.mxu0 0.0
    %538 = vmatprep.subr.mxu0 0.0
    %539 = vmatpush1.msra.mxu0 0.0
    %540 = vmatprep.subr.mxu0 0.0
    %541 = vmatpush1.msra.mxu0 0.0
    %542 = vmatprep.subr.mxu0 0.0
    %543 = vmatpush1.msra.mxu0 0.0
    %544 = vmatprep.subr.mxu0 0.0
    %545 = vmatpush1.msra.mxu0 0.0
    %546 = vmatprep.subr.mxu0 0.0
    %547 = vmatpush1.msra.mxu0 0.0
    %548 = vmatprep.subr.mxu0 0.0
    %549 = vmatpush1.msra.mxu0 0.0
    %550 = vmatprep.subr.mxu0 0.0
    %551 = vmatpush1.msra.mxu0 0.0
    %552 = vmatprep.subr.mxu0 0.0
    %553 = vmatpush1.msra.mxu0 0.0
    %554 = vmatprep.mubr.f32.mxu0 0.0
    %555 = vmatmul.mubr.f32.gmra.mrb[0].mxu0 %v488
    %v556 = vpop.f32.mrb[0].mxu0
    %v557 = vadd.f32 0.0, %v556
    %v558 = vpop.f32.mrb[0].mxu0
    %v559 = vadd.f32 0.0, %v558
    %560 = vdwg.mxu0
    %v562 = vrot.slane %v557, 5
    %v564 = vadd.f32 %v152, %v562
    %v565 = vxor.u32 %v564, 2147483648
    %v566 = vmul.f32 %v565, 1.442695
    %v567 = vpow.pop %v566
    %v568 = vadd.f32 %v567, 1.0
    %v569 = vrcp.pop %v568
    %v570 = vmul.f32 1.0, %v569
    %v571 = vadd.f32 %v559, %v188
    %v573 = vrot.slane %v571, 5
    %v575 = vmul.f32 %v570, %v573
    %v576 = vadd.f32 %v154, %v575
    %v577 = vtanh.pop %v576
    %v579 = vrot.slane %v570, 3
    %581 = vrot.lane.b32.xlu0 %v579, 64
    %v582 = vpop.permute.xlu0 %581
    %v584 = vrot.slane %v577, 1
    %v586 = vsub.f32 %v486, %v584
    %v588 = vrot.slane %v586, 2
    %v590 = vmul.f32 %v582, %v588
    %v592 = vrot.slane %v590, 5
    %v594 = vadd.f32 %v577, %v592
    %v596 = vrot.slane %v594, 3
    %598 = vmatprep.subr.mxu0 %v157
    %599 = vmatpush1.msra.mxu0 %v156
    %600 = vmatprep.subr.mxu0 %v159
    %601 = vmatpush1.msra.mxu0 %v158
    %602 = vmatprep.subr.mxu0 %v161
    %603 = vmatpush1.msra.mxu0 %v160
    %604 = vmatprep.subr.mxu0 %v163
    %605 = vmatpush1.msra.mxu0 %v162
    %606 = vmatprep.subr.mxu0 %v165
    %607 = vmatpush1.msra.mxu0 %v164
    %608 = vmatprep.subr.mxu0 %v167
    %609 = vmatpush1.msra.mxu0 %v166
    %610 = vmatprep.subr.mxu0 %v169
    %611 = vmatpush1.msra.mxu0 %v168
    %612 = vmatprep.subr.mxu0 %v171
    %613 = vmatpush1.msra.mxu0 %v170
    %614 = vmatprep.subr.mxu0 %v173
    %615 = vmatpush1.msra.mxu0 %v172
    %616 = vmatprep.subr.mxu0 %v175
    %617 = vmatpush1.msra.mxu0 %v174
    %618 = vmatprep.subr.mxu0 %v177
    %619 = vmatpush1.msra.mxu0 %v176
    %620 = vmatprep.subr.mxu0 %v179
    %621 = vmatpush1.msra.mxu0 %v178
    %622 = vmatprep.subr.mxu0 %v181
    %623 = vmatpush1.msra.mxu0 %v180
    %624 = vmatprep.subr.mxu0 %v183
    %625 = vmatpush1.msra.mxu0 %v182
    %626 = vmatprep.subr.mxu0 %v185
    %627 = vmatpush1.msra.mxu0 %v184
    %628 = vmatprep.subr.mxu0 %v187
    %629 = vmatpush1.msra.mxu0 %v186
    %630 = vmatprep.subr.mxu0 0.0
    %631 = vmatpush1.msra.mxu0 0.0
    %632 = vmatprep.subr.mxu0 0.0
    %633 = vmatpush1.msra.mxu0 0.0
    %634 = vmatprep.subr.mxu0 0.0
    %635 = vmatpush1.msra.mxu0 0.0
    %636 = vmatprep.subr.mxu0 0.0
    %637 = vmatpush1.msra.mxu0 0.0
    %638 = vmatprep.subr.mxu0 0.0
    %639 = vmatpush1.msra.mxu0 0.0
    %640 = vmatprep.subr.mxu0 0.0
    %641 = vmatpush1.msra.mxu0 0.0
    %642 = vmatprep.subr.mxu0 0.0
    %643 = vmatpush1.msra.mxu0 0.0
    %644 = vmatprep.subr.mxu0 0.0
    %645 = vmatpush1.msra.mxu0 0.0
    %646 = vmatprep.subr.mxu0 0.0
    %647 = vmatpush1.msra.mxu0 0.0
    %648 = vmatprep.subr.mxu0 0.0
    %649 = vmatpush1.msra.mxu0 0.0
    %650 = vmatprep.subr.mxu0 0.0
    %651 = vmatpush1.msra.mxu0 0.0
    %652 = vmatprep.subr.mxu0 0.0
    %653 = vmatpush1.msra.mxu0 0.0
    %654 = vmatprep.subr.mxu0 0.0
    %655 = vmatpush1.msra.mxu0 0.0
    %656 = vmatprep.subr.mxu0 0.0
    %657 = vmatpush1.msra.mxu0 0.0
    %658 = vmatprep.subr.mxu0 0.0
    %659 = vmatpush1.msra.mxu0 0.0
    %660 = vmatprep.subr.mxu0 0.0
    %661 = vmatpush1.msra.mxu0 0.0
    %662 = vmatprep.mubr.f32.mxu0 0.0
    %663 = vmatmul.mubr.f32.gmra.mrb[0].mxu0 %v596
    %v664 = vpop.f32.mrb[0].mxu0
    %v665 = vadd.f32 0.0, %v664
    %v666 = vpop.f32.mrb[0].mxu0
    %v667 = vadd.f32 0.0, %v666
    %668 = vdwg.mxu0
    %v670 = vrot.slane %v665, 4
    %v672 = vadd.f32 %v152, %v670
    %v673 = vxor.u32 %v672, 2147483648
    %v674 = vmul.f32 %v673, 1.442695
    %v675 = vpow.pop %v674
    %v676 = vadd.f32 %v675, 1.0
    %v677 = vrcp.pop %v676
    %v678 = vmul.f32 1.0, %v677
    %v679 = vadd.f32 %v667, %v188
    %v681 = vrot.slane %v679, 4
    %v683 = vmul.f32 %v678, %v681
    %v684 = vadd.f32 %v154, %v683
    %v685 = vtanh.pop %v684
    %v687 = vrot.slane %v678, 4
    %689 = vrot.lane.b32.xlu0 %v687, 64
    %v690 = vpop.permute.xlu0 %689
    %v692 = vrot.slane %v685, 1
    %v694 = vsub.f32 %v594, %v692
    %v696 = vrot.slane %v694, 3
    %v698 = vmul.f32 %v690, %v696
    %v700 = vrot.slane %v698, 4
    %v702 = vadd.f32 %v685, %v700
    %v704 = vrot.slane %v702, 4
    %706 = vmatprep.subr.mxu0 %v157
    %707 = vmatpush1.msra.mxu0 %v156
    %708 = vmatprep.subr.mxu0 %v159
    %709 = vmatpush1.msra.mxu0 %v158
    %710 = vmatprep.subr.mxu0 %v161
    %711 = vmatpush1.msra.mxu0 %v160
    %712 = vmatprep.subr.mxu0 %v163
    %713 = vmatpush1.msra.mxu0 %v162
    %714 = vmatprep.subr.mxu0 %v165
    %715 = vmatpush1.msra.mxu0 %v164
    %716 = vmatprep.subr.mxu0 %v167
    %717 = vmatpush1.msra.mxu0 %v166
    %718 = vmatprep.subr.mxu0 %v169
    %719 = vmatpush1.msra.mxu0 %v168
    %720 = vmatprep.subr.mxu0 %v171
    %721 = vmatpush1.msra.mxu0 %v170
    %722 = vmatprep.subr.mxu0 %v173
    %723 = vmatpush1.msra.mxu0 %v172
    %724 = vmatprep.subr.mxu0 %v175
    %725 = vmatpush1.msra.mxu0 %v174
    %726 = vmatprep.subr.mxu0 %v177
    %727 = vmatpush1.msra.mxu0 %v176
    %728 = vmatprep.subr.mxu0 %v179
    %729 = vmatpush1.msra.mxu0 %v178
    %730 = vmatprep.subr.mxu0 %v181
    %731 = vmatpush1.msra.mxu0 %v180
    %732 = vmatprep.subr.mxu0 %v183
    %733 = vmatpush1.msra.mxu0 %v182
    %734 = vmatprep.subr.mxu0 %v185
    %735 = vmatpush1.msra.mxu0 %v184
    %736 = vmatprep.subr.mxu0 %v187
    %737 = vmatpush1.msra.mxu0 %v186
    %738 = vmatprep.subr.mxu0 0.0
    %739 = vmatpush1.msra.mxu0 0.0
    %740 = vmatprep.subr.mxu0 0.0
    %741 = vmatpush1.msra.mxu0 0.0
    %742 = vmatprep.subr.mxu0 0.0
    %743 = vmatpush1.msra.mxu0 0.0
    %744 = vmatprep.subr.mxu0 0.0
    %745 = vmatpush1.msra.mxu0 0.0
    %746 = vmatprep.subr.mxu0 0.0
    %747 = vmatpush1.msra.mxu0 0.0
    %748 = vmatprep.subr.mxu0 0.0
    %749 = vmatpush1.msra.mxu0 0.0
    %750 = vmatprep.subr.mxu0 0.0
    %751 = vmatpush1.msra.mxu0 0.0
    %752 = vmatprep.subr.mxu0 0.0
    %753 = vmatpush1.msra.mxu0 0.0
    %754 = vmatprep.subr.mxu0 0.0
    %755 = vmatpush1.msra.mxu0 0.0
    %756 = vmatprep.subr.mxu0 0.0
    %757 = vmatpush1.msra.mxu0 0.0
    %758 = vmatprep.subr.mxu0 0.0
    %759 = vmatpush1.msra.mxu0 0.0
    %760 = vmatprep.subr.mxu0 0.0
    %761 = vmatpush1.msra.mxu0 0.0
    %762 = vmatprep.subr.mxu0 0.0
    %763 = vmatpush1.msra.mxu0 0.0
    %764 = vmatprep.subr.mxu0 0.0
    %765 = vmatpush1.msra.mxu0 0.0
    %766 = vmatprep.subr.mxu0 0.0
    %767 = vmatpush1.msra.mxu0 0.0
    %768 = vmatprep.subr.mxu0 0.0
    %769 = vmatpush1.msra.mxu0 0.0
    %770 = vmatprep.mubr.f32.mxu0 0.0
    %771 = vmatmul.mubr.f32.gmra.mrb[0].mxu0 %v704
    %v772 = vpop.f32.mrb[0].mxu0
    %v773 = vadd.f32 0.0, %v772
    %v774 = vpop.f32.mrb[0].mxu0
    %v775 = vadd.f32 0.0, %v774
    %776 = vdwg.mxu0
    %v778 = vrot.slane %v773, 3
    %v780 = vadd.f32 %v152, %v778
    %v781 = vxor.u32 %v780, 2147483648
    %v782 = vmul.f32 %v781, 1.442695
    %v783 = vpow.pop %v782
    %v784 = vadd.f32 %v783, 1.0
    %v785 = vrcp.pop %v784
    %v786 = vmul.f32 1.0, %v785
    %v787 = vadd.f32 %v775, %v188
    %v789 = vrot.slane %v787, 3
    %v791 = vmul.f32 %v786, %v789
    %v792 = vadd.f32 %v154, %v791
    %v793 = vtanh.pop %v792
    %v795 = vrot.slane %v786, 5
    %797 = vrot.lane.b32.xlu0 %v795, 64
    %v798 = vpop.permute.xlu0 %797
    %v800 = vrot.slane %v793, 1
    %v802 = vsub.f32 %v702, %v800
    %v804 = vrot.slane %v802, 4
    %v806 = vmul.f32 %v798, %v804
    %v808 = vrot.slane %v806, 3
    %v810 = vadd.f32 %v793, %v808
    %v812 = vrot.slane %v810, 5
    %814 = vmatprep.subr.mxu0 %v157
    %815 = vmatpush1.msra.mxu0 %v156
    %816 = vmatprep.subr.mxu0 %v159
    %817 = vmatpush1.msra.mxu0 %v158
    %818 = vmatprep.subr.mxu0 %v161
    %819 = vmatpush1.msra.mxu0 %v160
    %820 = vmatprep.subr.mxu0 %v163
    %821 = vmatpush1.msra.mxu0 %v162
    %822 = vmatprep.subr.mxu0 %v165
    %823 = vmatpush1.msra.mxu0 %v164
    %824 = vmatprep.subr.mxu0 %v167
    %825 = vmatpush1.msra.mxu0 %v166
    %826 = vmatprep.subr.mxu0 %v169
    %827 = vmatpush1.msra.mxu0 %v168
    %828 = vmatprep.subr.mxu0 %v171
    %829 = vmatpush1.msra.mxu0 %v170
    %830 = vmatprep.subr.mxu0 %v173
    %831 = vmatpush1.msra.mxu0 %v172
    %832 = vmatprep.subr.mxu0 %v175
    %833 = vmatpush1.msra.mxu0 %v174
    %834 = vmatprep.subr.mxu0 %v177
    %835 = vmatpush1.msra.mxu0 %v176
    %836 = vmatprep.subr.mxu0 %v179
    %837 = vmatpush1.msra.mxu0 %v178
    %838 = vmatprep.subr.mxu0 %v181
    %839 = vmatpush1.msra.mxu0 %v180
    %840 = vmatprep.subr.mxu0 %v183
    %841 = vmatpush1.msra.mxu0 %v182
    %842 = vmatprep.subr.mxu0 %v185
    %843 = vmatpush1.msra.mxu0 %v184
    %844 = vmatprep.subr.mxu0 %v187
    %845 = vmatpush1.msra.mxu0 %v186
    %846 = vmatprep.subr.mxu0 0.0
    %847 = vmatpush1.msra.mxu0 0.0
    %848 = vmatprep.subr.mxu0 0.0
    %849 = vmatpush1.msra.mxu0 0.0
    %850 = vmatprep.subr.mxu0 0.0
    %851 = vmatpush1.msra.mxu0 0.0
    %852 = vmatprep.subr.mxu0 0.0
    %853 = vmatpush1.msra.mxu0 0.0
    %854 = vmatprep.subr.mxu0 0.0
    %855 = vmatpush1.msra.mxu0 0.0
    %856 = vmatprep.subr.mxu0 0.0
    %857 = vmatpush1.msra.mxu0 0.0
    %858 = vmatprep.subr.mxu0 0.0
    %859 = vmatpush1.msra.mxu0 0.0
    %860 = vmatprep.subr.mxu0 0.0
    %861 = vmatpush1.msra.mxu0 0.0
    %862 = vmatprep.subr.mxu0 0.0
    %863 = vmatpush1.msra.mxu0 0.0
    %864 = vmatprep.subr.mxu0 0.0
    %865 = vmatpush1.msra.mxu0 0.0
    %866 = vmatprep.subr.mxu0 0.0
    %867 = vmatpush1.msra.mxu0 0.0
    %868 = vmatprep.subr.mxu0 0.0
    %869 = vmatpush1.msra.mxu0 0.0
    %870 = vmatprep.subr.mxu0 0.0
    %871 = vmatpush1.msra.mxu0 0.0
    %872 = vmatprep.subr.mxu0 0.0
    %873 = vmatpush1.msra.mxu0 0.0
    %874 = vmatprep.subr.mxu0 0.0
    %875 = vmatpush1.msra.mxu0 0.0
    %876 = vmatprep.subr.mxu0 0.0
    %877 = vmatpush1.msra.mxu0 0.0
    %878 = vmatprep.mubr.f32.mxu0 0.0
    %879 = vmatmul.mubr.f32.gmra.mrb[0].mxu0 %v812
    %v880 = vpop.f32.mrb[0].mxu0
    %v881 = vadd.f32 0.0, %v880
    %v882 = vpop.f32.mrb[0].mxu0
    %v883 = vadd.f32 0.0, %v882
    %884 = vdwg.mxu0
    %v886 = vrot.slane %v881, 2
    %v888 = vadd.f32 %v152, %v886
    %v889 = vxor.u32 %v888, 2147483648
    %v890 = vmul.f32 %v889, 1.442695
    %v891 = vpow.pop %v890
    %v892 = vadd.f32 %v891, 1.0
    %v893 = vrcp.pop %v892
    %v894 = vmul.f32 1.0, %v893
    %v895 = vadd.f32 %v883, %v188
    %v897 = vrot.slane %v895, 2
    %v899 = vmul.f32 %v894, %v897
    %v900 = vadd.f32 %v154, %v899
    %v901 = vtanh.pop %v900
    %v903 = vrot.slane %v894, 6
    %905 = vrot.lane.b32.xlu0 %v903, 64
    %v906 = vpop.permute.xlu0 %905
    %v908 = vrot.slane %v901, 1
    %v910 = vsub.f32 %v810, %v908
    %v912 = vrot.slane %v910, 5
    %v914 = vmul.f32 %v906, %v912
    %v916 = vrot.slane %v914, 2
    %v918 = vadd.f32 %v901, %v916
    %v920 = vrot.slane %v918, 6
    %922 = vmatprep.subr.mxu0 %v157
    %923 = vmatpush1.msra.mxu0 %v156
    %924 = vmatprep.subr.mxu0 %v159
    %925 = vmatpush1.msra.mxu0 %v158
    %926 = vmatprep.subr.mxu0 %v161
    %927 = vmatpush1.msra.mxu0 %v160
    %928 = vmatprep.subr.mxu0 %v163
    %929 = vmatpush1.msra.mxu0 %v162
    %930 = vmatprep.subr.mxu0 %v165
    %931 = vmatpush1.msra.mxu0 %v164
    %932 = vmatprep.subr.mxu0 %v167
    %933 = vmatpush1.msra.mxu0 %v166
    %934 = vmatprep.subr.mxu0 %v169
    %935 = vmatpush1.msra.mxu0 %v168
    %936 = vmatprep.subr.mxu0 %v171
    %937 = vmatpush1.msra.mxu0 %v170
    %938 = vmatprep.subr.mxu0 %v173
    %939 = vmatpush1.msra.mxu0 %v172
    %940 = vmatprep.subr.mxu0 %v175
    %941 = vmatpush1.msra.mxu0 %v174
    %942 = vmatprep.subr.mxu0 %v177
    %943 = vmatpush1.msra.mxu0 %v176
    %944 = vmatprep.subr.mxu0 %v179
    %945 = vmatpush1.msra.mxu0 %v178
    %946 = vmatprep.subr.mxu0 %v181
    %947 = vmatpush1.msra.mxu0 %v180
    %948 = vmatprep.subr.mxu0 %v183
    %949 = vmatpush1.msra.mxu0 %v182
    %950 = vmatprep.subr.mxu0 %v185
    %951 = vmatpush1.msra.mxu0 %v184
    %952 = vmatprep.subr.mxu0 %v187
    %953 = vmatpush1.msra.mxu0 %v186
    %954 = vmatprep.subr.mxu0 0.0
    %955 = vmatpush1.msra.mxu0 0.0
    %956 = vmatprep.subr.mxu0 0.0
    %957 = vmatpush1.msra.mxu0 0.0
    %958 = vmatprep.subr.mxu0 0.0
    %959 = vmatpush1.msra.mxu0 0.0
    %960 = vmatprep.subr.mxu0 0.0
    %961 = vmatpush1.msra.mxu0 0.0
    %962 = vmatprep.subr.mxu0 0.0
    %963 = vmatpush1.msra.mxu0 0.0
    %964 = vmatprep.subr.mxu0 0.0
    %965 = vmatpush1.msra.mxu0 0.0
    %966 = vmatprep.subr.mxu0 0.0
    %967 = vmatpush1.msra.mxu0 0.0
    %968 = vmatprep.subr.mxu0 0.0
    %969 = vmatpush1.msra.mxu0 0.0
    %970 = vmatprep.subr.mxu0 0.0
    %971 = vmatpush1.msra.mxu0 0.0
    %972 = vmatprep.subr.mxu0 0.0
    %973 = vmatpush1.msra.mxu0 0.0
    %974 = vmatprep.subr.mxu0 0.0
    %975 = vmatpush1.msra.mxu0 0.0
    %976 = vmatprep.subr.mxu0 0.0
    %977 = vmatpush1.msra.mxu0 0.0
    %978 = vmatprep.subr.mxu0 0.0
    %979 = vmatpush1.msra.mxu0 0.0
    %980 = vmatprep.subr.mxu0 0.0
    %981 = vmatpush1.msra.mxu0 0.0
    %982 = vmatprep.subr.mxu0 0.0
    %983 = vmatpush1.msra.mxu0 0.0
    %984 = vmatprep.subr.mxu0 0.0
    %985 = vmatpush1.msra.mxu0 0.0
    %986 = vmatprep.mubr.f32.mxu0 0.0
    %987 = vmatmul.mubr.f32.gmra.mrb[0].mxu0 %v920
    %v988 = vpop.f32.mrb[0].mxu0
    %v989 = vadd.f32 0.0, %v988
    %v990 = vpop.f32.mrb[0].mxu0
    %v991 = vadd.f32 0.0, %v990
    %992 = vdwg.mxu0
    %v994 = vrot.slane %v989, 1
    %v996 = vadd.f32 %v152, %v994
    %v997 = vxor.u32 %v996, 2147483648
    %v998 = vmul.f32 %v997, 1.442695
    %v999 = vpow.pop %v998
    %v1000 = vadd.f32 %v999, 1.0
    %v1001 = vrcp.pop %v1000
    %v1002 = vmul.f32 1.0, %v1001
    %v1003 = vadd.f32 %v991, %v188
    %v1005 = vrot.slane %v1003, 1
    %v1007 = vmul.f32 %v1002, %v1005
    %v1008 = vadd.f32 %v154, %v1007
    %v1009 = vtanh.pop %v1008
    %v1011 = vrot.slane %v1002, 7
    %1013 = vrot.lane.b32.xlu0 %v1011, 64
    %v1014 = vpop.permute.xlu0 %1013
    %v1016 = vrot.slane %v1009, 1
    %v1018 = vsub.f32 %v918, %v1016
    %v1020 = vrot.slane %v1018, 6
    %v1022 = vmul.f32 %v1014, %v1020
    %v1024 = vrot.slane %v1022, 1
    %v1026 = vadd.f32 %v1009, %v1024
    %1027 = vst [vmem:[%s9 - $0x7] sm:$0x80] %v1026
    %v1028 = vld [vmem:[#allocation5] sm:$0xff]
    %v1029 = vld [vmem:[#allocation5 + $0x8] sm:$0xff]
    %v1030 = vld [vmem:[#allocation5 + $0x10] sm:$0xff]
    %v1031 = vld [vmem:[#allocation5 + $0x18] sm:$0xff]
    %v1032 = vld [vmem:[#allocation5 + $0x20] sm:$0xff]
    %v1033 = vld [vmem:[#allocation5 + $0x28] sm:$0xff]
    %v1034 = vld [vmem:[#allocation5 + $0x30] sm:$0xff]
    %v1035 = vld [vmem:[#allocation5 + $0x38] sm:$0xff]
    %v1036 = vld [vmem:[#allocation5 + $0x40] sm:$0xff]
    %v1037 = vld [vmem:[#allocation5 + $0x48] sm:$0xff]
    %v1038 = vld [vmem:[#allocation5 + $0x50] sm:$0xff]
    %v1039 = vld [vmem:[#allocation5 + $0x58] sm:$0xff]
    %v1040 = vld [vmem:[#allocation5 + $0x60] sm:$0xff]
    %v1041 = vld [vmem:[#allocation5 + $0x68] sm:$0xff]
    %v1042 = vld [vmem:[#allocation5 + $0x70] sm:$0xff]
    %v1043 = vld [vmem:[#allocation5 + $0x78] sm:$0xff]
    %v1044 = vld [vmem:[%s7] sm:$0x1]
    %v1046 = vrot.slane %v1026, 7
    %1048 = vmatprep.subr.mxu0 0.0
    %1049 = vmatpush1.msra.mxu0 %v1028
    %1050 = vmatprep.subr.mxu0 0.0
    %1051 = vmatpush1.msra.mxu0 %v1029
    %1052 = vmatprep.subr.mxu0 0.0
    %1053 = vmatpush1.msra.mxu0 %v1030
    %1054 = vmatprep.subr.mxu0 0.0
    %1055 = vmatpush1.msra.mxu0 %v1031
    %1056 = vmatprep.subr.mxu0 0.0
    %1057 = vmatpush1.msra.mxu0 %v1032
    %1058 = vmatprep.subr.mxu0 0.0
    %1059 = vmatpush1.msra.mxu0 %v1033
    %1060 = vmatprep.subr.mxu0 0.0
    %1061 = vmatpush1.msra.mxu0 %v1034
    %1062 = vmatprep.subr.mxu0 0.0
    %1063 = vmatpush1.msra.mxu0 %v1035
    %1064 = vmatprep.subr.mxu0 0.0
    %1065 = vmatpush1.msra.mxu0 %v1036
    %1066 = vmatprep.subr.mxu0 0.0
    %1067 = vmatpush1.msra.mxu0 %v1037
    %1068 = vmatprep.subr.mxu0 0.0
    %1069 = vmatpush1.msra.mxu0 %v1038
    %1070 = vmatprep.subr.mxu0 0.0
    %1071 = vmatpush1.msra.mxu0 %v1039
    %1072 = vmatprep.subr.mxu0 0.0
    %1073 = vmatpush1.msra.mxu0 %v1040
    %1074 = vmatprep.subr.mxu0 0.0
    %1075 = vmatpush1.msra.mxu0 %v1041
    %1076 = vmatprep.subr.mxu0 0.0
    %1077 = vmatpush1.msra.mxu0 %v1042
    %1078 = vmatprep.subr.mxu0 0.0
    %1079 = vmatpush1.msra.mxu0 %v1043
    %1080 = vmatprep.subr.mxu0 0.0
    %1081 = vmatpush1.msra.mxu0 0.0
    %1082 = vmatprep.subr.mxu0 0.0
    %1083 = vmatpush1.msra.mxu0 0.0
    %1084 = vmatprep.subr.mxu0 0.0
    %1085 = vmatpush1.msra.mxu0 0.0
    %1086 = vmatprep.subr.mxu0 0.0
    %1087 = vmatpush1.msra.mxu0 0.0
    %1088 = vmatprep.subr.mxu0 0.0
    %1089 = vmatpush1.msra.mxu0 0.0
    %1090 = vmatprep.subr.mxu0 0.0
    %1091 = vmatpush1.msra.mxu0 0.0
    %1092 = vmatprep.subr.mxu0 0.0
    %1093 = vmatpush1.msra.mxu0 0.0
    %1094 = vmatprep.subr.mxu0 0.0
    %1095 = vmatpush1.msra.mxu0 0.0
    %1096 = vmatprep.subr.mxu0 0.0
    %1097 = vmatpush1.msra.mxu0 0.0
    %1098 = vmatprep.subr.mxu0 0.0
    %1099 = vmatpush1.msra.mxu0 0.0
    %1100 = vmatprep.subr.mxu0 0.0
    %1101 = vmatpush1.msra.mxu0 0.0
    %1102 = vmatprep.subr.mxu0 0.0
    %1103 = vmatpush1.msra.mxu0 0.0
    %1104 = vmatprep.subr.mxu0 0.0
    %1105 = vmatpush1.msra.mxu0 0.0
    %1106 = vmatprep.subr.mxu0 0.0
    %1107 = vmatpush1.msra.mxu0 0.0
    %1108 = vmatprep.subr.mxu0 0.0
    %1109 = vmatpush1.msra.mxu0 0.0
    %1110 = vmatprep.subr.mxu0 0.0
    %1111 = vmatpush1.msra.mxu0 0.0
    %1112 = vmatprep.mubr.f32.mxu0 0.0
    %1113 = vmatmul.mubr.f32.gmra.mrb[0].mxu0 %v1046
    %v1114 = vpop.f32.mrb[0].mxu0
    %v1115 = vadd.f32 %v1044, %v1114
    %v1116 = vpop.f32.mrb[0].mxu0
    %1117 = vdwg.mxu0
    %vm1118 = vcmask 1040384
    %v1119 = vsel %vm1118, %v1115, -inf
    %1120 = vmax.xlane.f32.xlu0 %v1119
    %v1121 = vpop.xlane.xlu0 %1120
    %v1122 = vsub.f32 %v1115, %v1121
    %v1123 = vmul.f32 %v1122, 1.442695
    %v1124 = vpow.pop %v1123
    %v1125 = vsel %vm1118, %v1124, 0.0
    %1126 = vadd.xlane.f32.xlu0 %v1125
    %v1127 = vpop.xlane.xlu0 %1126
    %v1128 = vlog2.pop %v1127
    %v1129 = vmul.f32 %v1128, 0.6931472
    %v1130 = vsub.f32 %v1122, %v1129
    %1131 = vst [vmem:[#allocation7] sm:$0x1] %v1130
    // Predicated region
    $region42: #{gru_light_forward.1} parent=1 // pred_check
      _
    $region43: #{gru_light_forward.1} parent=1 // pred_check_branch
      %1133 = sbr.rel (0) target = $region45
    $region44: #{gru_light_forward.1} parent=1 // pred_region
      %s1135 = ssub.s32 16, 16
      %1136 = vsyncadd [#allocation4], %s1135
      %s1138 = sshll.u32 [#allocation7], 4
      %s1139 = int_to_ptr.vmem [resolvable:$true] %s1138
      %1141 = dma.vmem_to_hbm [thread:$0]  %s1139, 16, %s8, [#allocation4]
    $region45: #{gru_light_forward.1} parent=1 // pred_fallthru
      _
    // Predicated region
    $region46: #{gru_light_forward.1} parent=1 // pred_check
      _
    $region47: #{gru_light_forward.1} parent=1 // pred_check_branch
      %1143 = sbr.rel (0) target = $region49
    $region48: #{gru_light_forward.1} parent=1 // pred_region
      _
    $region49: #{gru_light_forward.1} parent=1 // pred_fallthru
      _
    // Predicated region
    $region50: #{gru_light_forward.1} parent=1 // pred_check
      _
    $region51: #{gru_light_forward.1} parent=1 // pred_check_branch
      %1145 = sbr.rel (0) target = $region53
    $region52: #{gru_light_forward.1} parent=1 // pred_region
      %1146 = dma.done [#allocation4], 16
    $region53: #{gru_light_forward.1} parent=1 // pred_fallthru
      _
    // Predicated region
    $region54: #{gru_light_forward.1} parent=1 // pred_check
      _
    $region55: #{gru_light_forward.1} parent=1 // pred_check_branch
      %1148 = sbr.rel (0) target = $region57
    $region56: #{gru_light_forward.1} parent=1 // pred_region
      _
    $region57: #{gru_light_forward.1} parent=1 // pred_fallthru
      _
    %1149 = vsyncpa [#allocation3], 1
    %1150 = vsyncpa [#allocation6], 1
    %1151 = vsyncpa [#allocation4], 1

</llo_original>
